<compile_context>
chip_gen: v7x
topology: tpu7x:2x2x1
jax: 0.10.0
libtpu: 0.0.40
codegen_flags: <defaults>
</compile_context>

<pallas_src>
import jax
import jax.numpy as jnp
from jax.experimental import pallas as pl
from jax.experimental.pallas import tpu as pltpu

H1, H2, H3 = 512, 256, 128


def _leaky_relu(x, slope=0.01):
    # Identical to where(x > 0, x, slope * x) for slope in (0, 1), one VPU op less.
    return jnp.maximum(x, slope * x)


def _round_up(x, m):
    return ((x + m - 1) // m) * m


# -----------------------------------------------------------------------------
# Kernel: fused 3-layer MLP.  Matmul operands are cast to the weight dtype
# (bf16 by default) on the VPU, accumulation stays f32 via
# preferred_element_type, bias-add + LeakyReLU stay f32.
# -----------------------------------------------------------------------------
def mlp_kernel(x_ref, w1_ref, b1_ref, w2_ref, b2_ref, w3_ref, b3_ref, o_ref):
    x = x_ref[...].astype(w1_ref.dtype)          # in-kernel cast, under the DMA
    h = jnp.dot(x, w1_ref[...], preferred_element_type=jnp.float32)
    h = _leaky_relu(h + b1_ref[...])
    h = jnp.dot(h.astype(w2_ref.dtype), w2_ref[...],
                preferred_element_type=jnp.float32)
    h = _leaky_relu(h + b2_ref[...])
    h = jnp.dot(h.astype(w3_ref.dtype), w3_ref[...],
                preferred_element_type=jnp.float32)
    o_ref[...] = (h + b3_ref[...]).astype(o_ref.dtype)


# -----------------------------------------------------------------------------
# Hardware / tiling heuristics
# -----------------------------------------------------------------------------
def _tpu_info():
    """(dual_tensorcore, vmem_capacity_bytes) with conservative fallbacks."""
    try:
        kind = jax.devices()[0].device_kind.lower()
    except Exception:  # pragma: no cover
        kind = ""
    dual_tc = "v7" in kind
    try:
        vmem_cap = int(pltpu.get_tpu_info().vmem_capacity_bytes)
    except Exception:  # pragma: no cover
        vmem_cap = 64 * 1024 * 1024  # conservative (v7x per-TC VMEM)
    return dual_tc, vmem_cap


def _vmem_estimate(tm, d_in, x_itemsize, w_itemsize, x_buffers=2):
    """Rough per-step VMEM working set for the fused kernel."""
    weight_bytes = ((d_in * H1 + H1 * H2 + H2 * H3) * w_itemsize
                    + (H1 + H2 + H3) * 4)
    x_tiles = x_buffers * tm * d_in * x_itemsize          # pipelined x buffers
    out_tiles = 2 * tm * H3 * 4                           # double-buffered out
    temps = tm * (H1 + H2 + H3) * 4 + tm * (H1 + H2) * w_itemsize
    return weight_bytes + x_tiles + out_tiles + temps


def _choose_tm(batch, d_in, x_itemsize, w_itemsize, *, dual_tc, vmem_cap):
    """Batch tile: as large as possible; split only for v7x's 2 TensorCores."""
    batch = max(batch, 1)
    if dual_tc:
        if batch >= 512:
            # Two+ tiles, each aligned to the 256-row MXU granularity.
            tm = min(_round_up((batch + 1) // 2, 256), 1024)
        elif batch >= 16:
            tm = _round_up((batch + 1) // 2, 8)
        else:
            tm = _round_up(batch, 8)
    else:
        # Single TensorCore: the grid is a serial loop -> one big tile if it fits.
        tm = min(_round_up(batch, 8), 1024)
    # Shrink until the working set fits a conservative share of VMEM.
    budget = int(0.70 * vmem_cap)
    while tm > 8 and _vmem_estimate(tm, d_in, x_itemsize, w_itemsize) > budget:
        tm = max(8, _round_up(tm // 2, 8))
    return tm


# -----------------------------------------------------------------------------
# Wrapper
# -----------------------------------------------------------------------------
def prepare_params(params, dtype=jnp.bfloat16):
    """Cast weights once (bf16 by default) and biases to f32 [1, H]."""
    w1, b1, w2, b2, w3, b3 = params
    return (w1.astype(dtype), b1.reshape(1, -1).astype(jnp.float32),
            w2.astype(dtype), b2.reshape(1, -1).astype(jnp.float32),
            w3.astype(dtype), b3.reshape(1, -1).astype(jnp.float32))


def text_clip_forward(x, params, *, tm=None):
    """x: [B, input_dim] float32.  Returns [B, 128] float32.

    `params` should be the output of prepare_params() (bf16 weights, f32
    biases) so that no per-call casting happens outside the kernel.  Passing
    f32 weights gives an f32-operand mode (slower, closer to f32 parity).
    """
    w1, b1, w2, b2, w3, b3 = params
    # Defensive no-ops when params were already prepared.
    b1 = b1.reshape(1, -1).astype(jnp.float32)
    b2 = b2.reshape(1, -1).astype(jnp.float32)
    b3 = b3.reshape(1, -1).astype(jnp.float32)

    B, D_in = x.shape
    x_sz = x.dtype.itemsize
    w_sz = w1.dtype.itemsize

    dual_tc, vmem_cap = _tpu_info()
    if tm is None:
        tm = _choose_tm(B, D_in, x_sz, w_sz, dual_tc=dual_tc, vmem_cap=vmem_cap)

    grid = (pl.cdiv(B, tm),)   # ragged last tile handled by Pallas masking

    # Deeper x pipelining only when the per-step x DMA is big and VMEM allows.
    x_tile_bytes = tm * D_in * x_sz
    x_buffers = 2
    if (x_tile_bytes >= 4 * 1024 * 1024
            and _vmem_estimate(tm, D_in, x_sz, w_sz, 3) < int(0.70 * vmem_cap)):
        x_buffers = 3
    x_spec_kwargs = {}
    if x_buffers == 3:
        x_spec_kwargs["pipeline_mode"] = pl.Buffered(3)
    x_spec = pl.BlockSpec((tm, D_in), lambda i: (i, 0), **x_spec_kwargs)

    weight_bytes = ((D_in * H1 + H1 * H2 + H2 * H3) * w_sz
                    + (H1 + H2 + H3) * 4)
    flops = 2 * B * (D_in * H1 + H1 * H2 + H2 * H3)
    bytes_accessed = B * D_in * x_sz + B * H3 * 4 + weight_bytes

    vmem_est = _vmem_estimate(tm, D_in, x_sz, w_sz, x_buffers)
    vmem_limit = int(min(0.90 * vmem_cap, max(32 * 1024 * 1024, 2 * vmem_est)))
    vmem_limit = max(vmem_limit, vmem_est + (1 << 20))  # never below the estimate

    # Weights / biases: untiled, resident in VMEM (no double-buffer reservation).
    resident = pl.BlockSpec(memory_space=pltpu.MemorySpace.VMEM)

    out = pl.pallas_call(
        mlp_kernel,
        out_shape=jax.ShapeDtypeStruct((B, H3), jnp.float32),
        grid_spec=pltpu.PrefetchScalarGridSpec(
            num_scalar_prefetch=0,
            grid=grid,
            in_specs=[
                x_spec,                 # x tile (pipelined, f32, cast in-kernel)
                resident, resident,     # W1, b1
                resident, resident,     # W2, b2
                resident, resident,     # W3, b3
            ],
            out_specs=pl.BlockSpec((tm, H3), lambda i: (i, 0)),
        ),
        compiler_params=pltpu.CompilerParams(
            dimension_semantics=("parallel",),
            vmem_limit_bytes=vmem_limit,
        ),
        cost_estimate=pl.CostEstimate(
            flops=flops, transcendentals=0, bytes_accessed=bytes_accessed),
    )(x, w1, b1, w2, b2, w3, b3)

    return out


# -----------------------------------------------------------------------------
# Synthetic params + pure-JAX reference
# -----------------------------------------------------------------------------
def init_params(key, input_dim):
    """Deterministic synthetic parameters (weights stored as nn.Linear.weight.T)."""
    k1, k2, k3, k4, k5, k6 = jax.random.split(key, 6)
    w1 = jax.random.normal(k1, (input_dim, H1), jnp.float32) * 0.02
    b1 = jax.random.normal(k2, (H1,), jnp.float32) * 0.02
    w2 = jax.random.normal(k3, (H1, H2), jnp.float32) * 0.02
    b2 = jax.random.normal(k4, (H2,), jnp.float32) * 0.02
    w3 = jax.random.normal(k5, (H2, H3), jnp.float32) * 0.02
    b3 = jax.random.normal(k6, (H3,), jnp.float32) * 0.02
    return (w1, b1, w2, b2, w3, b3)


def reference_forward(x, params):
    w1, b1, w2, b2, w3, b3 = params
    h = _leaky_relu(x @ w1 + b1)
    h = _leaky_relu(h @ w2 + b2)
    return h @ w3 + b3


if __name__ == "__main__":
    key = jax.random.PRNGKey(0)
    kx, kp = jax.random.split(key)

    B, input_dim = 16, 32
    x = jax.random.normal(kx, (B, input_dim), jnp.float32)
    params = init_params(kp, input_dim)

    # Cast weights to bf16 exactly once (not per forward call).
    prepared = prepare_params(params, dtype=jnp.bfloat16)

    fwd = jax.jit(text_clip_forward)
    out = jax.block_until_ready(fwd(x, prepared))

    ref = reference_forward(x, params)  # pure f32 reference
    assert out.shape == (B, H3)
    # bf16 matmul operands -> compare with a relative-to-max tolerance.
    err = float(jnp.max(jnp.abs(out - ref)) / (jnp.max(jnp.abs(ref)) + 1e-8))
    assert err < 2.5e-2, f"mismatch vs reference, rel err = {err}"

    print("KERNEL_OK")
</pallas_src>

<mosaic_0001>
module attributes {stable_mosaic.version = 11 : i64} {
  func.func @mlp_kernel(%arg0: i32, %arg1: memref<16x32xf32, #tpu.memory_space<vmem>>, %arg2: memref<32x512xbf16, #tpu.memory_space<vmem>>, %arg3: memref<1x512xf32, #tpu.memory_space<vmem>>, %arg4: memref<512x256xbf16, #tpu.memory_space<vmem>>, %arg5: memref<1x256xf32, #tpu.memory_space<vmem>>, %arg6: memref<256x128xbf16, #tpu.memory_space<vmem>>, %arg7: memref<1x128xf32, #tpu.memory_space<vmem>>, %arg8: memref<16x128xf32, #tpu.memory_space<vmem>>) attributes {dimension_semantics = [#tpu.dimension_semantics<parallel>], iteration_bounds = array<i64: 1>, scalar_prefetch = 0 : i64, scratch_operands = 0 : i64, tpu.core_type = #tpu.core_type<tc>, window_params = [{transform_indices = @transform_0, window_bounds = array<i64: 16, 32>}, {pipeline_mode = #tpu.pipeline_mode<synchronous>, transform_indices = @transform_1, window_bounds = array<i64: 32, 512>}, {pipeline_mode = #tpu.pipeline_mode<synchronous>, transform_indices = @transform_2, window_bounds = array<i64: 1, 512>}, {pipeline_mode = #tpu.pipeline_mode<synchronous>, transform_indices = @transform_3, window_bounds = array<i64: 512, 256>}, {pipeline_mode = #tpu.pipeline_mode<synchronous>, transform_indices = @transform_4, window_bounds = array<i64: 1, 256>}, {pipeline_mode = #tpu.pipeline_mode<synchronous>, transform_indices = @transform_5, window_bounds = array<i64: 256, 128>}, {pipeline_mode = #tpu.pipeline_mode<synchronous>, transform_indices = @transform_6, window_bounds = array<i64: 1, 128>}, {transform_indices = @transform_7, window_bounds = array<i64: 16, 128>}]} {
    %c0 = arith.constant 0 : index
    %c0_0 = arith.constant 0 : index
    %0 = vector.load %arg1[%c0, %c0_0] : memref<16x32xf32, #tpu.memory_space<vmem>>, vector<16x32xf32>
    %1 = arith.truncf %0 : vector<16x32xf32> to vector<16x32xbf16>
    %c0_1 = arith.constant 0 : index
    %c0_2 = arith.constant 0 : index
    %2 = vector.load %arg2[%c0_1, %c0_2] : memref<32x512xbf16, #tpu.memory_space<vmem>>, vector<32x512xbf16>
    %cst = arith.constant dense<0.000000e+00> : vector<16x512xf32>
    %3 = tpu.matmul %1, %2, %cst {dimension_numbers = #tpu.dot_dimension_numbers<[1], [0], [0], [1], [0, 0, 1, 1], [], []>} : vector<16x32xbf16>, vector<32x512xbf16>, vector<16x512xf32> -> vector<16x512xf32>
    %c0_3 = arith.constant 0 : index
    %c0_4 = arith.constant 0 : index
    %4 = vector.load %arg3[%c0_3, %c0_4] : memref<1x512xf32, #tpu.memory_space<vmem>>, vector<1x512xf32>
    %5 = vector.broadcast %4 : vector<1x512xf32> to vector<16x512xf32>
    %6 = arith.addf %3, %5 : vector<16x512xf32>
    %cst_5 = arith.constant 0.00999999977 : f32
    %7 = vector.broadcast %cst_5 : f32 to vector<16x512xf32>
    %8 = arith.mulf %7, %6 : vector<16x512xf32>
    %9 = arith.maximumf %6, %8 : vector<16x512xf32>
    %10 = arith.truncf %9 : vector<16x512xf32> to vector<16x512xbf16>
    %c0_6 = arith.constant 0 : index
    %c0_7 = arith.constant 0 : index
    %11 = vector.load %arg4[%c0_6, %c0_7] : memref<512x256xbf16, #tpu.memory_space<vmem>>, vector<512x256xbf16>
    %cst_8 = arith.constant dense<0.000000e+00> : vector<16x256xf32>
    %12 = tpu.matmul %10, %11, %cst_8 {dimension_numbers = #tpu.dot_dimension_numbers<[1], [0], [0], [1], [0, 0, 1, 1], [], []>} : vector<16x512xbf16>, vector<512x256xbf16>, vector<16x256xf32> -> vector<16x256xf32>
    %c0_9 = arith.constant 0 : index
    %c0_10 = arith.constant 0 : index
    %13 = vector.load %arg5[%c0_9, %c0_10] : memref<1x256xf32, #tpu.memory_space<vmem>>, vector<1x256xf32>
    %14 = vector.broadcast %13 : vector<1x256xf32> to vector<16x256xf32>
    %15 = arith.addf %12, %14 : vector<16x256xf32>
    %cst_11 = arith.constant 0.00999999977 : f32
    %16 = vector.broadcast %cst_11 : f32 to vector<16x256xf32>
    %17 = arith.mulf %16, %15 : vector<16x256xf32>
    %18 = arith.maximumf %15, %17 : vector<16x256xf32>
    %19 = arith.truncf %18 : vector<16x256xf32> to vector<16x256xbf16>
    %c0_12 = arith.constant 0 : index
    %c0_13 = arith.constant 0 : index
    %20 = vector.load %arg6[%c0_12, %c0_13] : memref<256x128xbf16, #tpu.memory_space<vmem>>, vector<256x128xbf16>
    %cst_14 = arith.constant dense<0.000000e+00> : vector<16x128xf32>
    %21 = tpu.matmul %19, %20, %cst_14 {dimension_numbers = #tpu.dot_dimension_numbers<[1], [0], [0], [1], [0, 0, 1, 1], [], []>} : vector<16x256xbf16>, vector<256x128xbf16>, vector<16x128xf32> -> vector<16x128xf32>
    %c0_15 = arith.constant 0 : index
    %c0_16 = arith.constant 0 : index
    %22 = vector.load %arg7[%c0_15, %c0_16] : memref<1x128xf32, #tpu.memory_space<vmem>>, vector<1x128xf32>
    %23 = vector.broadcast %22 : vector<1x128xf32> to vector<16x128xf32>
    %24 = arith.addf %21, %23 : vector<16x128xf32>
    %c0_17 = arith.constant 0 : index
    %c0_18 = arith.constant 0 : index
    %25 = vector.load %arg8[%c0_17, %c0_18] : memref<16x128xf32, #tpu.memory_space<vmem>>, vector<16x128xf32>
    tpu.vector_store %arg8[%c0_17, %c0_18], %24 {strides = array<i32>} : memref<16x128xf32, #tpu.memory_space<vmem>>, vector<16x128xf32>,
    return
  }
  func.func @transform_0(%arg0: i32) -> (i32, i32) {
    %c0_i32 = arith.constant 0 : i32
    %c0_i32_0 = arith.constant 0 : i32
    return %arg0, %c0_i32 : i32, i32
  }
  func.func @transform_1(%arg0: i32) -> (i32, i32) {
    %c0_i32 = arith.constant 0 : i32
    %c0_i32_0 = arith.constant 0 : i32
    %c0_i32_1 = arith.constant 0 : i32
    return %c0_i32, %c0_i32_0 : i32, i32
  }
  func.func @transform_2(%arg0: i32) -> (i32, i32) {
    %c0_i32 = arith.constant 0 : i32
    %c0_i32_0 = arith.constant 0 : i32
    %c0_i32_1 = arith.constant 0 : i32
    return %c0_i32, %c0_i32_0 : i32, i32
  }
  func.func @transform_3(%arg0: i32) -> (i32, i32) {
    %c0_i32 = arith.constant 0 : i32
    %c0_i32_0 = arith.constant 0 : i32
    %c0_i32_1 = arith.constant 0 : i32
    return %c0_i32, %c0_i32_0 : i32, i32
  }
  func.func @transform_4(%arg0: i32) -> (i32, i32) {
    %c0_i32 = arith.constant 0 : i32
    %c0_i32_0 = arith.constant 0 : i32
    %c0_i32_1 = arith.constant 0 : i32
    return %c0_i32, %c0_i32_0 : i32, i32
  }
  func.func @transform_5(%arg0: i32) -> (i32, i32) {
    %c0_i32 = arith.constant 0 : i32
    %c0_i32_0 = arith.constant 0 : i32
    %c0_i32_1 = arith.constant 0 : i32
    return %c0_i32, %c0_i32_0 : i32, i32
  }
  func.func @transform_6(%arg0: i32) -> (i32, i32) {
    %c0_i32 = arith.constant 0 : i32
    %c0_i32_0 = arith.constant 0 : i32
    %c0_i32_1 = arith.constant 0 : i32
    return %c0_i32, %c0_i32_0 : i32, i32
  }
  func.func @transform_7(%arg0: i32) -> (i32, i32) {
    %c0_i32 = arith.constant 0 : i32
    %c0_i32_0 = arith.constant 0 : i32
    return %arg0, %c0_i32 : i32, i32
  }
}

</mosaic_0001>

<llo_original>
// kernel: text_clip_forward.1
$region0: #{text_clip_forward.1}
  #allocation0 [shape = 'u32[]', space=smem, size = 0x4, offset = 0x4, fixed_abs, tag = 'smem constant byte address 0x4 - core index']
  #allocation1 [shape = 'u32[144,128]{1,0:T(1,128)}', space=vmem, size = 0x12000, scoped, tag = 'internal scratch']
  %s0 = inlined_call_operand.hbm [shape: f32[16,32], index: 0, kind: input, shape index: {}]
  %s1 = inlined_call_operand.hbm [shape: bf16[32,512], index: 1, kind: input, shape index: {}]
  %s2 = inlined_call_operand.vmem [shape: f32[1,512], index: 2, kind: input, shape index: {}]
  %s3 = inlined_call_operand.hbm [shape: bf16[512,256], index: 3, kind: input, shape index: {}]
  %s4 = inlined_call_operand.vmem [shape: f32[1,256], index: 4, kind: input, shape index: {}]
  %s5 = inlined_call_operand.hbm [shape: bf16[256,128], index: 5, kind: input, shape index: {}]
  %s6 = inlined_call_operand.vmem [shape: f32[1,128], index: 6, kind: input, shape index: {}]
  %s7 = inlined_call_operand.hbm [shape: f32[16,128], index: 7, kind: output, shape index: {}]
  %s8 = sld [smem:[#allocation0]]
  $region54: #{text_clip_forward.1} parent=0
    _
  %s10 = ssub.s32 1, %s8
  %s11 = scalar_select 0, %s10, %s8
  $region1: #{text_clip_forward.1} parent=0
    #allocation2 [shape = 'u8[8192]{0}', space=vmem, size = 0x2000, scoped, tag = 'input window, operand 0, single buffered']
    #allocation3 [shape = 's32[1]{0}', space=sflag, size = 0x4, scoped, tag = 'scoped memory for text_clip_forward.1']
    #allocation4 [shape = 's32[1]{0}', space=sflag, size = 0x4, scoped, tag = 'scoped memory for text_clip_forward.1']
    #allocation5 [shape = 'u8[32768]{0}', space=vmem, size = 0x8000, scoped, tag = 'input window, operand 1, single buffered']
    #allocation6 [shape = 's32[1]{0}', space=sflag, size = 0x4, scoped, tag = 'scoped memory for text_clip_forward.1']
    #allocation7 [shape = 'u8[262144]{0}', space=vmem, size = 0x40000, scoped, tag = 'input window, operand 3, single buffered']
    #allocation8 [shape = 'u8[65536]{0}', space=vmem, size = 0x10000, scoped, tag = 'input window, operand 5, single buffered']
    #allocation9 [shape = 's32[1]{0}', space=sflag, size = 0x4, scoped, tag = 'scoped memory for text_clip_forward.1']
    #allocation10 [shape = 'u8[8192]{0}', space=vmem, size = 0x2000, scoped, tag = 'output window, operand 0, single buffered']
    %12 = vsyncpa [#allocation3], 0
    %13 = vsyncpa [#allocation6], 0
    %14 = vsyncpa [#allocation9], 0
    %15 = vsyncpa [#allocation4], 0
    // Predicated region
    $region2: #{text_clip_forward.1} parent=1 // pred_check
      _
    $region3: #{text_clip_forward.1} parent=1 // pred_check_branch
      %17 = sbr.rel (0) target = $region5
    $region4: #{text_clip_forward.1} parent=1 // pred_region
      %s19 = ssub.s32 256, 256
      %20 = vsyncadd [#allocation3], %s19
      %s21 = sshll.u32 [#allocation2], 4
      %s22 = int_to_ptr.vmem [resolvable:$true] %s21
      %27 = dma.hbm_to_vmem [thread:$0]  %s0, 256, %s22, [#allocation3], 128, 128, 8
    $region5: #{text_clip_forward.1} parent=1 // pred_fallthru
      _
    // Predicated region
    $region6: #{text_clip_forward.1} parent=1 // pred_check
      _
    $region7: #{text_clip_forward.1} parent=1 // pred_check_branch
      %29 = sbr.rel (0) target = $region9
    $region8: #{text_clip_forward.1} parent=1 // pred_region
      %s31 = ssub.s32 1024, 1024
      %32 = vsyncadd [#allocation6], %s31
      %s33 = sshll.u32 [#allocation5], 4
      %s34 = int_to_ptr.vmem [resolvable:$true] %s33
      %39 = dma.hbm_to_vmem [thread:$0]  %s1, 1024, %s34, [#allocation6], 256, 256, 16
    $region9: #{text_clip_forward.1} parent=1 // pred_fallthru
      _
    // Predicated region
    $region10: #{text_clip_forward.1} parent=1 // pred_check
      _
    $region11: #{text_clip_forward.1} parent=1 // pred_check_branch
      %41 = sbr.rel (0) target = $region13
    $region12: #{text_clip_forward.1} parent=1 // pred_region
      _
    $region13: #{text_clip_forward.1} parent=1 // pred_fallthru
      _
    // Predicated region
    $region14: #{text_clip_forward.1} parent=1 // pred_check
      _
    $region15: #{text_clip_forward.1} parent=1 // pred_check_branch
      %43 = sbr.rel (0) target = $region17
    $region16: #{text_clip_forward.1} parent=1 // pred_region
      %s45 = ssub.s32 8192, 8192
      %46 = vsyncadd [#allocation6], %s45
      %s47 = sshll.u32 [#allocation7], 4
      %s48 = int_to_ptr.vmem [resolvable:$true] %s47
      %53 = dma.hbm_to_vmem [thread:$0]  %s3, 8192, %s48, [#allocation6], 128, 128, 8
    $region17: #{text_clip_forward.1} parent=1 // pred_fallthru
      _
    // Predicated region
    $region18: #{text_clip_forward.1} parent=1 // pred_check
      _
    $region19: #{text_clip_forward.1} parent=1 // pred_check_branch
      %55 = sbr.rel (0) target = $region21
    $region20: #{text_clip_forward.1} parent=1 // pred_region
      _
    $region21: #{text_clip_forward.1} parent=1 // pred_fallthru
      _
    // Predicated region
    $region22: #{text_clip_forward.1} parent=1 // pred_check
      _
    $region23: #{text_clip_forward.1} parent=1 // pred_check_branch
      %57 = sbr.rel (0) target = $region25
    $region24: #{text_clip_forward.1} parent=1 // pred_region
      %s59 = ssub.s32 2048, 2048
      %60 = vsyncadd [#allocation9], %s59
      %s61 = sshll.u32 [#allocation8], 4
      %s62 = int_to_ptr.vmem [resolvable:$true] %s61
      %67 = dma.hbm_to_vmem [thread:$0]  %s5, 2048, %s62, [#allocation9], 64, 64, 4
    $region25: #{text_clip_forward.1} parent=1 // pred_fallthru
      _
    // Predicated region
    $region26: #{text_clip_forward.1} parent=1 // pred_check
      _
    $region27: #{text_clip_forward.1} parent=1 // pred_check_branch
      %69 = sbr.rel (0) target = $region29
    $region28: #{text_clip_forward.1} parent=1 // pred_region
      _
    $region29: #{text_clip_forward.1} parent=1 // pred_fallthru
      _
    // Predicated region
    $region30: #{text_clip_forward.1} parent=1 // pred_check
      _
    $region31: #{text_clip_forward.1} parent=1 // pred_check_branch
      %71 = sbr.rel (0) target = $region33
    $region32: #{text_clip_forward.1} parent=1 // pred_region
      %72 = dma.done [#allocation3], 256
    $region33: #{text_clip_forward.1} parent=1 // pred_fallthru
      _
    // Predicated region
    $region34: #{text_clip_forward.1} parent=1 // pred_check
      _
    $region35: #{text_clip_forward.1} parent=1 // pred_check_branch
      %74 = sbr.rel (0) target = $region37
    $region36: #{text_clip_forward.1} parent=1 // pred_region
      %75 = dma.done [#allocation6], 1024
    $region37: #{text_clip_forward.1} parent=1 // pred_fallthru
      _
    // Predicated region
    $region38: #{text_clip_forward.1} parent=1 // pred_check
      _
    $region39: #{text_clip_forward.1} parent=1 // pred_check_branch
      %77 = sbr.rel (0) target = $region41
    $region40: #{text_clip_forward.1} parent=1 // pred_region
      %78 = dma.done [#allocation6], 8192
    $region41: #{text_clip_forward.1} parent=1 // pred_fallthru
      _
    // Predicated region
    $region42: #{text_clip_forward.1} parent=1 // pred_check
      _
    $region43: #{text_clip_forward.1} parent=1 // pred_check_branch
      %80 = sbr.rel (0) target = $region45
    $region44: #{text_clip_forward.1} parent=1 // pred_region
      %81 = dma.done [#allocation9], 2048
    $region45: #{text_clip_forward.1} parent=1 // pred_fallthru
      _
    %v83 = vld [vmem:[#allocation2] sm:$0xff]
    %v84 = vld [vmem:[#allocation2 + $0x8] sm:$0xff]
    %v85 = vpack.c.bf16 %v84, %v83
    %v86 = vld [vmem:[#allocation5] sm:$0xff]
    %v87 = vld [vmem:[#allocation5 + $0x8] sm:$0xff]
    %v88 = vld [vmem:[#allocation5 + $0x10] sm:$0xff]
    %v89 = vld [vmem:[#allocation5 + $0x18] sm:$0xff]
    %v90 = vld [vmem:[#allocation5 + $0x20] sm:$0xff]
    %v91 = vld [vmem:[#allocation5 + $0x28] sm:$0xff]
    %v92 = vld [vmem:[#allocation5 + $0x30] sm:$0xff]
    %v93 = vld [vmem:[#allocation5 + $0x38] sm:$0xff]
    %v94 = vld [vmem:[%s2] sm:$0xf]
    %v96 = vlaneseq
    %v97 = vshrl.u32 %v96, 7
    %v98 = vsub.s32 0, %v97
    %v99 = vrot.slane %v94, %v98
    %v100 = vlaneseq
    %v101 = vshrl.u32 %v100, 7
    %v102 = vsub.s32 1, %v101
    %v103 = vrot.slane %v94, %v102
    %v104 = vlaneseq
    %v105 = vshrl.u32 %v104, 7
    %v106 = vsub.s32 2, %v105
    %v107 = vrot.slane %v94, %v106
    %v108 = vlaneseq
    %v109 = vshrl.u32 %v108, 7
    %v110 = vsub.s32 3, %v109
    %v111 = vrot.slane %v94, %v110
    %v124 = vunpack.c.l.b16 %v86
    %v125 = vunpack.c.h.b16 %v86
    %v126 = vunpack.c.l.b16 %v87
    %v127 = vunpack.c.h.b16 %v87
    %v128 = vunpack.c.l.b16 %v88
    %v129 = vunpack.c.h.b16 %v88
    %v130 = vunpack.c.l.b16 %v89
    %v131 = vunpack.c.h.b16 %v89
    %v132 = vunpack.c.l.b16 %v90
    %v133 = vunpack.c.h.b16 %v90
    %v134 = vunpack.c.l.b16 %v91
    %v135 = vunpack.c.h.b16 %v91
    %v136 = vunpack.c.l.b16 %v92
    %v137 = vunpack.c.h.b16 %v92
    %v138 = vunpack.c.l.b16 %v93
    %v139 = vunpack.c.h.b16 %v93
    %v140 = vpack.c.b16 %v128, %v124
    %v141 = vpack.c.b16 %v129, %v125
    %v142 = vpack.c.b16 %v130, %v126
    %v143 = vpack.c.b16 %v131, %v127
    %v144 = vpack.c.b16 %v136, %v132
    %v145 = vpack.c.b16 %v137, %v133
    %v146 = vpack.c.b16 %v138, %v134
    %v147 = vpack.c.b16 %v139, %v135
    %vm156 = vcmask 261120
    %v158 = vsel %vm156, %v85, 0
    %160 = vmatprep.subr.bf16.mxu0 %v141
    %161 = vmatpush1.bf16.msra.mxu0 %v140
    %162 = vmatprep.subr.bf16.mxu0 %v145
    %163 = vmatpush1.bf16.msra.mxu0 %v144
    %164 = vmatprep.subr.bf16.mxu0 0
    %165 = vmatpush1.bf16.msra.mxu0 0
    %166 = vmatprep.subr.bf16.mxu0 0
    %167 = vmatpush1.bf16.msra.mxu0 0
    %168 = vmatprep.subr.bf16.mxu0 0
    %169 = vmatpush1.bf16.msra.mxu0 0
    %170 = vmatprep.subr.bf16.mxu0 0
    %171 = vmatpush1.bf16.msra.mxu0 0
    %172 = vmatprep.subr.bf16.mxu0 0
    %173 = vmatpush1.bf16.msra.mxu0 0
    %174 = vmatprep.subr.bf16.mxu0 0
    %175 = vmatpush1.bf16.msra.mxu0 0
    %176 = vmatprep.subr.bf16.mxu0 0
    %177 = vmatpush1.bf16.msra.mxu0 0
    %178 = vmatprep.subr.bf16.mxu0 0
    %179 = vmatpush1.bf16.msra.mxu0 0
    %180 = vmatprep.subr.bf16.mxu0 0
    %181 = vmatpush1.bf16.msra.mxu0 0
    %182 = vmatprep.subr.bf16.mxu0 0
    %183 = vmatpush1.bf16.msra.mxu0 0
    %184 = vmatprep.subr.bf16.mxu0 0
    %185 = vmatpush1.bf16.msra.mxu0 0
    %186 = vmatprep.subr.bf16.mxu0 0
    %187 = vmatpush1.bf16.msra.mxu0 0
    %188 = vmatprep.subr.bf16.mxu0 0
    %189 = vmatpush1.bf16.msra.mxu0 0
    %190 = vmatprep.subr.bf16.mxu0 0
    %191 = vmatpush1.bf16.msra.mxu0 0
    %192 = vmatprep.mubr.bf16.mxu0 0
    %193 = vmatmul.mubr.bf16.gmra.mrb[0].mxu0 %v158
    %v194 = vpop.f32.mrb[0].mxu0
    %v195 = vadd.f32 %v99, %v194
    %v196 = vpop.f32.mrb[0].mxu0
    %v197 = vadd.f32 %v103, %v196
    %v198 = vpop.f32.mrb[0].mxu0
    %v199 = vadd.f32 %v99, %v198
    %v200 = vpop.f32.mrb[0].mxu0
    %v201 = vadd.f32 %v103, %v200
    %202 = vdwg.mxu0
    %203 = vmatprep.subr.bf16.mxu0 %v143
    %204 = vmatpush1.bf16.msra.mxu0 %v142
    %205 = vmatprep.subr.bf16.mxu0 %v147
    %206 = vmatpush1.bf16.msra.mxu0 %v146
    %207 = vmatprep.subr.bf16.mxu0 0
    %208 = vmatpush1.bf16.msra.mxu0 0
    %209 = vmatprep.subr.bf16.mxu0 0
    %210 = vmatpush1.bf16.msra.mxu0 0
    %211 = vmatprep.subr.bf16.mxu0 0
    %212 = vmatpush1.bf16.msra.mxu0 0
    %213 = vmatprep.subr.bf16.mxu0 0
    %214 = vmatpush1.bf16.msra.mxu0 0
    %215 = vmatprep.subr.bf16.mxu0 0
    %216 = vmatpush1.bf16.msra.mxu0 0
    %217 = vmatprep.subr.bf16.mxu0 0
    %218 = vmatpush1.bf16.msra.mxu0 0
    %219 = vmatprep.subr.bf16.mxu0 0
    %220 = vmatpush1.bf16.msra.mxu0 0
    %221 = vmatprep.subr.bf16.mxu0 0
    %222 = vmatpush1.bf16.msra.mxu0 0
    %223 = vmatprep.subr.bf16.mxu0 0
    %224 = vmatpush1.bf16.msra.mxu0 0
    %225 = vmatprep.subr.bf16.mxu0 0
    %226 = vmatpush1.bf16.msra.mxu0 0
    %227 = vmatprep.subr.bf16.mxu0 0
    %228 = vmatpush1.bf16.msra.mxu0 0
    %229 = vmatprep.subr.bf16.mxu0 0
    %230 = vmatpush1.bf16.msra.mxu0 0
    %231 = vmatprep.subr.bf16.mxu0 0
    %232 = vmatpush1.bf16.msra.mxu0 0
    %233 = vmatprep.subr.bf16.mxu0 0
    %234 = vmatpush1.bf16.msra.mxu0 0
    %235 = vmatprep.mubr.bf16.mxu0 0
    %236 = vmatmul.mubr.bf16.gmra.mrb[0].mxu0 %v158
    %v237 = vpop.f32.mrb[0].mxu0
    %v238 = vadd.f32 %v107, %v237
    %v239 = vpop.f32.mrb[0].mxu0
    %v240 = vadd.f32 %v111, %v239
    %v241 = vpop.f32.mrb[0].mxu0
    %v242 = vadd.f32 %v107, %v241
    %v243 = vpop.f32.mrb[0].mxu0
    %v244 = vadd.f32 %v111, %v243
    %245 = vdwg.mxu0
    %v246 = vmul.f32 %v195, 0.01
    %v247 = vmul.f32 %v197, 0.01
    %v248 = vmul.f32 %v238, 0.01
    %v249 = vmul.f32 %v240, 0.01
    %v250 = vmul.f32 %v199, 0.01
    %v251 = vmul.f32 %v201, 0.01
    %v252 = vmul.f32 %v242, 0.01
    %v253 = vmul.f32 %v244, 0.01
    %v254 = vmax.f32 %v195, %v246
    %v255 = vmax.f32 %v197, %v247
    %v256 = vmax.f32 %v238, %v248
    %v257 = vmax.f32 %v240, %v249
    %v258 = vmax.f32 %v199, %v250
    %v259 = vmax.f32 %v201, %v251
    %v260 = vmax.f32 %v242, %v252
    %v261 = vmax.f32 %v244, %v253
    %v262 = vpack.c.bf16 %v258, %v254
    %v263 = vpack.c.bf16 %v259, %v255
    %v264 = vpack.c.bf16 %v260, %v256
    %v265 = vpack.c.bf16 %v261, %v257
    %v266 = vld [vmem:[#allocation7] sm:$0xff]
    %v267 = vld [vmem:[#allocation7 + $0x8] sm:$0xff]
    %v268 = vld [vmem:[#allocation7 + $0x10] sm:$0xff]
    %v269 = vld [vmem:[#allocation7 + $0x18] sm:$0xff]
    %v270 = vld [vmem:[#allocation7 + $0x20] sm:$0xff]
    %v271 = vld [vmem:[#allocation7 + $0x28] sm:$0xff]
    %v272 = vld [vmem:[#allocation7 + $0x30] sm:$0xff]
    %v273 = vld [vmem:[#allocation7 + $0x38] sm:$0xff]
    %v274 = vld [vmem:[#allocation7 + $0x40] sm:$0xff]
    %v275 = vld [vmem:[#allocation7 + $0x48] sm:$0xff]
    %v276 = vld [vmem:[#allocation7 + $0x50] sm:$0xff]
    %v277 = vld [vmem:[#allocation7 + $0x58] sm:$0xff]
    %v278 = vld [vmem:[#allocation7 + $0x60] sm:$0xff]
    %v279 = vld [vmem:[#allocation7 + $0x68] sm:$0xff]
    %v280 = vld [vmem:[#allocation7 + $0x70] sm:$0xff]
    %v281 = vld [vmem:[#allocation7 + $0x78] sm:$0xff]
    %v282 = vld [vmem:[#allocation7 + $0x80] sm:$0xff]
    %v283 = vld [vmem:[#allocation7 + $0x88] sm:$0xff]
    %v284 = vld [vmem:[#allocation7 + $0x90] sm:$0xff]
    %v285 = vld [vmem:[#allocation7 + $0x98] sm:$0xff]
    %v286 = vld [vmem:[#allocation7 + $0xa0] sm:$0xff]
    %v287 = vld [vmem:[#allocation7 + $0xa8] sm:$0xff]
    %v288 = vld [vmem:[#allocation7 + $0xb0] sm:$0xff]
    %v289 = vld [vmem:[#allocation7 + $0xb8] sm:$0xff]
    %v290 = vld [vmem:[#allocation7 + $0xc0] sm:$0xff]
    %v291 = vld [vmem:[#allocation7 + $0xc8] sm:$0xff]
    %v292 = vld [vmem:[#allocation7 + $0xd0] sm:$0xff]
    %v293 = vld [vmem:[#allocation7 + $0xd8] sm:$0xff]
    %v294 = vld [vmem:[#allocation7 + $0xe0] sm:$0xff]
    %v295 = vld [vmem:[#allocation7 + $0xe8] sm:$0xff]
    %v296 = vld [vmem:[#allocation7 + $0xf0] sm:$0xff]
    %v297 = vld [vmem:[#allocation7 + $0xf8] sm:$0xff]
    %v298 = vld [vmem:[#allocation7 + $0x100] sm:$0xff]
    %v299 = vld [vmem:[#allocation7 + $0x108] sm:$0xff]
    %v300 = vld [vmem:[#allocation7 + $0x110] sm:$0xff]
    %v301 = vld [vmem:[#allocation7 + $0x118] sm:$0xff]
    %v302 = vld [vmem:[#allocation7 + $0x120] sm:$0xff]
    %v303 = vld [vmem:[#allocation7 + $0x128] sm:$0xff]
    %v304 = vld [vmem:[#allocation7 + $0x130] sm:$0xff]
    %v305 = vld [vmem:[#allocation7 + $0x138] sm:$0xff]
    %v306 = vld [vmem:[#allocation7 + $0x140] sm:$0xff]
    %v307 = vld [vmem:[#allocation7 + $0x148] sm:$0xff]
    %v308 = vld [vmem:[#allocation7 + $0x150] sm:$0xff]
    %v309 = vld [vmem:[#allocation7 + $0x158] sm:$0xff]
    %v310 = vld [vmem:[#allocation7 + $0x160] sm:$0xff]
    %v311 = vld [vmem:[#allocation7 + $0x168] sm:$0xff]
    %v312 = vld [vmem:[#allocation7 + $0x170] sm:$0xff]
    %v313 = vld [vmem:[#allocation7 + $0x178] sm:$0xff]
    %v314 = vld [vmem:[#allocation7 + $0x180] sm:$0xff]
    %v315 = vld [vmem:[#allocation7 + $0x188] sm:$0xff]
    %v316 = vld [vmem:[#allocation7 + $0x190] sm:$0xff]
    %v317 = vld [vmem:[#allocation7 + $0x198] sm:$0xff]
    %v318 = vld [vmem:[#allocation7 + $0x1a0] sm:$0xff]
    %v319 = vld [vmem:[#allocation7 + $0x1a8] sm:$0xff]
    %v320 = vld [vmem:[#allocation7 + $0x1b0] sm:$0xff]
    %v321 = vld [vmem:[#allocation7 + $0x1b8] sm:$0xff]
    %v322 = vld [vmem:[#allocation7 + $0x1c0] sm:$0xff]
    %v323 = vld [vmem:[#allocation7 + $0x1c8] sm:$0xff]
    %v324 = vld [vmem:[#allocation7 + $0x1d0] sm:$0xff]
    %v325 = vld [vmem:[#allocation7 + $0x1d8] sm:$0xff]
    %v326 = vld [vmem:[#allocation7 + $0x1e0] sm:$0xff]
    %v327 = vld [vmem:[#allocation7 + $0x1e8] sm:$0xff]
    %v328 = vld [vmem:[#allocation7 + $0x1f0] sm:$0xff]
    %v329 = vld [vmem:[#allocation7 + $0x1f8] sm:$0xff]
    %v330 = vld [vmem:[%s4] sm:$0x3]
    %v332 = vlaneseq
    %v333 = vshrl.u32 %v332, 7
    %v334 = vsub.s32 0, %v333
    %v335 = vrot.slane %v330, %v334
    %v336 = vlaneseq
    %v337 = vshrl.u32 %v336, 7
    %v338 = vsub.s32 1, %v337
    %v339 = vrot.slane %v330, %v338
    %v406 = vunpack.c.l.b16 %v266
    %v407 = vunpack.c.h.b16 %v266
    %v408 = vunpack.c.l.b16 %v267
    %v409 = vunpack.c.h.b16 %v267
    %v410 = vunpack.c.l.b16 %v268
    %v411 = vunpack.c.h.b16 %v268
    %v412 = vunpack.c.l.b16 %v269
    %v413 = vunpack.c.h.b16 %v269
    %v414 = vunpack.c.l.b16 %v270
    %v415 = vunpack.c.h.b16 %v270
    %v416 = vunpack.c.l.b16 %v271
    %v417 = vunpack.c.h.b16 %v271
    %v418 = vunpack.c.l.b16 %v272
    %v419 = vunpack.c.h.b16 %v272
    %v420 = vunpack.c.l.b16 %v273
    %v421 = vunpack.c.h.b16 %v273
    %v422 = vunpack.c.l.b16 %v274
    %v423 = vunpack.c.h.b16 %v274
    %v424 = vunpack.c.l.b16 %v275
    %v425 = vunpack.c.h.b16 %v275
    %v426 = vunpack.c.l.b16 %v276
    %v427 = vunpack.c.h.b16 %v276
    %v428 = vunpack.c.l.b16 %v277
    %v429 = vunpack.c.h.b16 %v277
    %v430 = vunpack.c.l.b16 %v278
    %v431 = vunpack.c.h.b16 %v278
    %v432 = vunpack.c.l.b16 %v279
    %v433 = vunpack.c.h.b16 %v279
    %v434 = vunpack.c.l.b16 %v280
    %v435 = vunpack.c.h.b16 %v280
    %v436 = vunpack.c.l.b16 %v281
    %v437 = vunpack.c.h.b16 %v281
    %v438 = vunpack.c.l.b16 %v282
    %v439 = vunpack.c.h.b16 %v282
    %v440 = vunpack.c.l.b16 %v283
    %v441 = vunpack.c.h.b16 %v283
    %v442 = vunpack.c.l.b16 %v284
    %v443 = vunpack.c.h.b16 %v284
    %v444 = vunpack.c.l.b16 %v285
    %v445 = vunpack.c.h.b16 %v285
    %v446 = vunpack.c.l.b16 %v286
    %v447 = vunpack.c.h.b16 %v286
    %v448 = vunpack.c.l.b16 %v287
    %v449 = vunpack.c.h.b16 %v287
    %v450 = vunpack.c.l.b16 %v288
    %v451 = vunpack.c.h.b16 %v288
    %v452 = vunpack.c.l.b16 %v289
    %v453 = vunpack.c.h.b16 %v289
    %v454 = vunpack.c.l.b16 %v290
    %v455 = vunpack.c.h.b16 %v290
    %v456 = vunpack.c.l.b16 %v291
    %v457 = vunpack.c.h.b16 %v291
    %v458 = vunpack.c.l.b16 %v292
    %v459 = vunpack.c.h.b16 %v292
    %v460 = vunpack.c.l.b16 %v293
    %v461 = vunpack.c.h.b16 %v293
    %v462 = vunpack.c.l.b16 %v294
    %v463 = vunpack.c.h.b16 %v294
    %v464 = vunpack.c.l.b16 %v295
    %v465 = vunpack.c.h.b16 %v295
    %v466 = vunpack.c.l.b16 %v296
    %v467 = vunpack.c.h.b16 %v296
    %v468 = vunpack.c.l.b16 %v297
    %v469 = vunpack.c.h.b16 %v297
    %v470 = vunpack.c.l.b16 %v298
    %v471 = vunpack.c.h.b16 %v298
    %v472 = vunpack.c.l.b16 %v299
    %v473 = vunpack.c.h.b16 %v299
    %v474 = vunpack.c.l.b16 %v300
    %v475 = vunpack.c.h.b16 %v300
    %v476 = vunpack.c.l.b16 %v301
    %v477 = vunpack.c.h.b16 %v301
    %v478 = vunpack.c.l.b16 %v302
    %v479 = vunpack.c.h.b16 %v302
    %v480 = vunpack.c.l.b16 %v303
    %v481 = vunpack.c.h.b16 %v303
    %v482 = vunpack.c.l.b16 %v304
    %v483 = vunpack.c.h.b16 %v304
    %v484 = vunpack.c.l.b16 %v305
    %v485 = vunpack.c.h.b16 %v305
    %v486 = vunpack.c.l.b16 %v306
    %v487 = vunpack.c.h.b16 %v306
    %v488 = vunpack.c.l.b16 %v307
    %v489 = vunpack.c.h.b16 %v307
    %v490 = vunpack.c.l.b16 %v308
    %v491 = vunpack.c.h.b16 %v308
    %v492 = vunpack.c.l.b16 %v309
    %v493 = vunpack.c.h.b16 %v309
    %v494 = vunpack.c.l.b16 %v310
    %v495 = vunpack.c.h.b16 %v310
    %v496 = vunpack.c.l.b16 %v311
    %v497 = vunpack.c.h.b16 %v311
    %v498 = vunpack.c.l.b16 %v312
    %v499 = vunpack.c.h.b16 %v312
    %v500 = vunpack.c.l.b16 %v313
    %v501 = vunpack.c.h.b16 %v313
    %v502 = vunpack.c.l.b16 %v314
    %v503 = vunpack.c.h.b16 %v314
    %v504 = vunpack.c.l.b16 %v315
    %v505 = vunpack.c.h.b16 %v315
    %v506 = vunpack.c.l.b16 %v316
    %v507 = vunpack.c.h.b16 %v316
    %v508 = vunpack.c.l.b16 %v317
    %v509 = vunpack.c.h.b16 %v317
    %v510 = vunpack.c.l.b16 %v318
    %v511 = vunpack.c.h.b16 %v318
    %v512 = vunpack.c.l.b16 %v319
    %v513 = vunpack.c.h.b16 %v319
    %v514 = vunpack.c.l.b16 %v320
    %v515 = vunpack.c.h.b16 %v320
    %v516 = vunpack.c.l.b16 %v321
    %v517 = vunpack.c.h.b16 %v321
    %v518 = vunpack.c.l.b16 %v322
    %v519 = vunpack.c.h.b16 %v322
    %v520 = vunpack.c.l.b16 %v323
    %v521 = vunpack.c.h.b16 %v323
    %v522 = vunpack.c.l.b16 %v324
    %v523 = vunpack.c.h.b16 %v324
    %v524 = vunpack.c.l.b16 %v325
    %v525 = vunpack.c.h.b16 %v325
    %v526 = vunpack.c.l.b16 %v326
    %v527 = vunpack.c.h.b16 %v326
    %v528 = vunpack.c.l.b16 %v327
    %v529 = vunpack.c.h.b16 %v327
    %v530 = vunpack.c.l.b16 %v328
    %v531 = vunpack.c.h.b16 %v328
    %v532 = vunpack.c.l.b16 %v329
    %v533 = vunpack.c.h.b16 %v329
    %v534 = vpack.c.b16 %v408, %v406
    %v535 = vpack.c.b16 %v409, %v407
    %v536 = vpack.c.b16 %v412, %v410
    %v537 = vpack.c.b16 %v413, %v411
    %v538 = vpack.c.b16 %v416, %v414
    %v539 = vpack.c.b16 %v417, %v415
    %v540 = vpack.c.b16 %v420, %v418
    %v541 = vpack.c.b16 %v421, %v419
    %v542 = vpack.c.b16 %v424, %v422
    %v543 = vpack.c.b16 %v425, %v423
    %v544 = vpack.c.b16 %v428, %v426
    %v545 = vpack.c.b16 %v429, %v427
    %v546 = vpack.c.b16 %v432, %v430
    %v547 = vpack.c.b16 %v433, %v431
    %v548 = vpack.c.b16 %v436, %v434
    %v549 = vpack.c.b16 %v437, %v435
    %v550 = vpack.c.b16 %v440, %v438
    %v551 = vpack.c.b16 %v441, %v439
    %v552 = vpack.c.b16 %v444, %v442
    %v553 = vpack.c.b16 %v445, %v443
    %v554 = vpack.c.b16 %v448, %v446
    %v555 = vpack.c.b16 %v449, %v447
    %v556 = vpack.c.b16 %v452, %v450
    %v557 = vpack.c.b16 %v453, %v451
    %v558 = vpack.c.b16 %v456, %v454
    %v559 = vpack.c.b16 %v457, %v455
    %v560 = vpack.c.b16 %v460, %v458
    %v561 = vpack.c.b16 %v461, %v459
    %v562 = vpack.c.b16 %v464, %v462
    %v563 = vpack.c.b16 %v465, %v463
    %v564 = vpack.c.b16 %v468, %v466
    %v565 = vpack.c.b16 %v469, %v467
    %v566 = vpack.c.b16 %v472, %v470
    %v567 = vpack.c.b16 %v473, %v471
    %v568 = vpack.c.b16 %v476, %v474
    %v569 = vpack.c.b16 %v477, %v475
    %v570 = vpack.c.b16 %v480, %v478
    %v571 = vpack.c.b16 %v481, %v479
    %v572 = vpack.c.b16 %v484, %v482
    %v573 = vpack.c.b16 %v485, %v483
    %v574 = vpack.c.b16 %v488, %v486
    %v575 = vpack.c.b16 %v489, %v487
    %v576 = vpack.c.b16 %v492, %v490
    %v577 = vpack.c.b16 %v493, %v491
    %v578 = vpack.c.b16 %v496, %v494
    %v579 = vpack.c.b16 %v497, %v495
    %v580 = vpack.c.b16 %v500, %v498
    %v581 = vpack.c.b16 %v501, %v499
    %v582 = vpack.c.b16 %v504, %v502
    %v583 = vpack.c.b16 %v505, %v503
    %v584 = vpack.c.b16 %v508, %v506
    %v585 = vpack.c.b16 %v509, %v507
    %v586 = vpack.c.b16 %v512, %v510
    %v587 = vpack.c.b16 %v513, %v511
    %v588 = vpack.c.b16 %v516, %v514
    %v589 = vpack.c.b16 %v517, %v515
    %v590 = vpack.c.b16 %v520, %v518
    %v591 = vpack.c.b16 %v521, %v519
    %v592 = vpack.c.b16 %v524, %v522
    %v593 = vpack.c.b16 %v525, %v523
    %v594 = vpack.c.b16 %v528, %v526
    %v595 = vpack.c.b16 %v529, %v527
    %v596 = vpack.c.b16 %v532, %v530
    %v597 = vpack.c.b16 %v533, %v531
    %662 = vmatprep.subr.bf16.mxu0 %v535
    %663 = vmatpush1.bf16.msra.mxu0 %v534
    %664 = vmatprep.subr.bf16.mxu0 %v537
    %665 = vmatpush1.bf16.msra.mxu0 %v536
    %666 = vmatprep.subr.bf16.mxu0 %v539
    %667 = vmatpush1.bf16.msra.mxu0 %v538
    %668 = vmatprep.subr.bf16.mxu0 %v541
    %669 = vmatpush1.bf16.msra.mxu0 %v540
    %670 = vmatprep.subr.bf16.mxu0 %v543
    %671 = vmatpush1.bf16.msra.mxu0 %v542
    %672 = vmatprep.subr.bf16.mxu0 %v545
    %673 = vmatpush1.bf16.msra.mxu0 %v544
    %674 = vmatprep.subr.bf16.mxu0 %v547
    %675 = vmatpush1.bf16.msra.mxu0 %v546
    %676 = vmatprep.subr.bf16.mxu0 %v549
    %677 = vmatpush1.bf16.msra.mxu0 %v548
    %678 = vmatprep.subr.bf16.mxu0 %v551
    %679 = vmatpush1.bf16.msra.mxu0 %v550
    %680 = vmatprep.subr.bf16.mxu0 %v553
    %681 = vmatpush1.bf16.msra.mxu0 %v552
    %682 = vmatprep.subr.bf16.mxu0 %v555
    %683 = vmatpush1.bf16.msra.mxu0 %v554
    %684 = vmatprep.subr.bf16.mxu0 %v557
    %685 = vmatpush1.bf16.msra.mxu0 %v556
    %686 = vmatprep.subr.bf16.mxu0 %v559
    %687 = vmatpush1.bf16.msra.mxu0 %v558
    %688 = vmatprep.subr.bf16.mxu0 %v561
    %689 = vmatpush1.bf16.msra.mxu0 %v560
    %690 = vmatprep.subr.bf16.mxu0 %v563
    %691 = vmatpush1.bf16.msra.mxu0 %v562
    %692 = vmatprep.subr.bf16.mxu0 %v565
    %693 = vmatpush1.bf16.msra.mxu0 %v564
    %694 = vmatprep.mubr.bf16.mxu0 %v263
    %695 = vmatmul.mubr.bf16.gmra.mrb[0].mxu0 %v262
    %v696 = vpop.f32.mrb[0].mxu0
    %v697 = vadd.f32 %v335, %v696
    %v698 = vpop.f32.mrb[0].mxu0
    %v699 = vadd.f32 %v339, %v698
    %v700 = vpop.f32.mrb[0].mxu0
    %v701 = vadd.f32 %v335, %v700
    %v702 = vpop.f32.mrb[0].mxu0
    %v703 = vadd.f32 %v339, %v702
    %704 = vdwg.mxu0
    %705 = vmatprep.subr.bf16.mxu0 %v567
    %706 = vmatpush1.bf16.msra.mxu0 %v566
    %707 = vmatprep.subr.bf16.mxu0 %v569
    %708 = vmatpush1.bf16.msra.mxu0 %v568
    %709 = vmatprep.subr.bf16.mxu0 %v571
    %710 = vmatpush1.bf16.msra.mxu0 %v570
    %711 = vmatprep.subr.bf16.mxu0 %v573
    %712 = vmatpush1.bf16.msra.mxu0 %v572
    %713 = vmatprep.subr.bf16.mxu0 %v575
    %714 = vmatpush1.bf16.msra.mxu0 %v574
    %715 = vmatprep.subr.bf16.mxu0 %v577
    %716 = vmatpush1.bf16.msra.mxu0 %v576
    %717 = vmatprep.subr.bf16.mxu0 %v579
    %718 = vmatpush1.bf16.msra.mxu0 %v578
    %719 = vmatprep.subr.bf16.mxu0 %v581
    %720 = vmatpush1.bf16.msra.mxu0 %v580
    %721 = vmatprep.subr.bf16.mxu0 %v583
    %722 = vmatpush1.bf16.msra.mxu0 %v582
    %723 = vmatprep.subr.bf16.mxu0 %v585
    %724 = vmatpush1.bf16.msra.mxu0 %v584
    %725 = vmatprep.subr.bf16.mxu0 %v587
    %726 = vmatpush1.bf16.msra.mxu0 %v586
    %727 = vmatprep.subr.bf16.mxu0 %v589
    %728 = vmatpush1.bf16.msra.mxu0 %v588
    %729 = vmatprep.subr.bf16.mxu0 %v591
    %730 = vmatpush1.bf16.msra.mxu0 %v590
    %731 = vmatprep.subr.bf16.mxu0 %v593
    %732 = vmatpush1.bf16.msra.mxu0 %v592
    %733 = vmatprep.subr.bf16.mxu0 %v595
    %734 = vmatpush1.bf16.msra.mxu0 %v594
    %735 = vmatprep.subr.bf16.mxu0 %v597
    %736 = vmatpush1.bf16.msra.mxu0 %v596
    %737 = vmatprep.mubr.bf16.mxu0 %v265
    %738 = vmatmul.mubr.bf16.gmra.mrb[0].mxu0 %v264
    %v739 = vpop.f32.mrb[0].mxu0
    %v740 = vadd.f32 %v697, %v739
    %v741 = vpop.f32.mrb[0].mxu0
    %v742 = vadd.f32 %v699, %v741
    %v743 = vpop.f32.mrb[0].mxu0
    %v744 = vadd.f32 %v701, %v743
    %v745 = vpop.f32.mrb[0].mxu0
    %v746 = vadd.f32 %v703, %v745
    %747 = vdwg.mxu0
    %v748 = vmul.f32 %v740, 0.01
    %v749 = vmul.f32 %v742, 0.01
    %v750 = vmul.f32 %v744, 0.01
    %v751 = vmul.f32 %v746, 0.01
    %v752 = vmax.f32 %v740, %v748
    %v753 = vmax.f32 %v742, %v749
    %v754 = vmax.f32 %v744, %v750
    %v755 = vmax.f32 %v746, %v751
    %v756 = vpack.c.bf16 %v754, %v752
    %v757 = vpack.c.bf16 %v755, %v753
    %v758 = vld [vmem:[#allocation8] sm:$0xf]
    %v759 = vld [vmem:[#allocation8 + $0x4] sm:$0xf]
    %v760 = vld [vmem:[#allocation8 + $0x8] sm:$0xf]
    %v761 = vld [vmem:[#allocation8 + $0xc] sm:$0xf]
    %v762 = vld [vmem:[#allocation8 + $0x10] sm:$0xf]
    %v763 = vld [vmem:[#allocation8 + $0x14] sm:$0xf]
    %v764 = vld [vmem:[#allocation8 + $0x18] sm:$0xf]
    %v765 = vld [vmem:[#allocation8 + $0x1c] sm:$0xf]
    %v766 = vld [vmem:[#allocation8 + $0x20] sm:$0xf]
    %v767 = vld [vmem:[#allocation8 + $0x24] sm:$0xf]
    %v768 = vld [vmem:[#allocation8 + $0x28] sm:$0xf]
    %v769 = vld [vmem:[#allocation8 + $0x2c] sm:$0xf]
    %v770 = vld [vmem:[#allocation8 + $0x30] sm:$0xf]
    %v771 = vld [vmem:[#allocation8 + $0x34] sm:$0xf]
    %v772 = vld [vmem:[#allocation8 + $0x38] sm:$0xf]
    %v773 = vld [vmem:[#allocation8 + $0x3c] sm:$0xf]
    %v774 = vld [vmem:[#allocation8 + $0x40] sm:$0xf]
    %v775 = vld [vmem:[#allocation8 + $0x44] sm:$0xf]
    %v776 = vld [vmem:[#allocation8 + $0x48] sm:$0xf]
    %v777 = vld [vmem:[#allocation8 + $0x4c] sm:$0xf]
    %v778 = vld [vmem:[#allocation8 + $0x50] sm:$0xf]
    %v779 = vld [vmem:[#allocation8 + $0x54] sm:$0xf]
    %v780 = vld [vmem:[#allocation8 + $0x58] sm:$0xf]
    %v781 = vld [vmem:[#allocation8 + $0x5c] sm:$0xf]
    %v782 = vld [vmem:[#allocation8 + $0x60] sm:$0xf]
    %v783 = vld [vmem:[#allocation8 + $0x64] sm:$0xf]
    %v784 = vld [vmem:[#allocation8 + $0x68] sm:$0xf]
    %v785 = vld [vmem:[#allocation8 + $0x6c] sm:$0xf]
    %v786 = vld [vmem:[#allocation8 + $0x70] sm:$0xf]
    %v787 = vld [vmem:[#allocation8 + $0x74] sm:$0xf]
    %v788 = vld [vmem:[#allocation8 + $0x78] sm:$0xf]
    %v789 = vld [vmem:[#allocation8 + $0x7c] sm:$0xf]
    %v790 = vld [vmem:[%s6] sm:$0x1]
    %v792 = vlaneseq
    %v793 = vshrl.u32 %v792, 7
    %v794 = vsub.s32 0, %v793
    %v795 = vrot.slane %v790, %v794
    %v829 = vunpack.c.l.b16 %v758
    %v830 = vunpack.c.l.b16 %v759
    %v831 = vunpack.c.l.b16 %v760
    %v832 = vunpack.c.l.b16 %v761
    %v833 = vunpack.c.l.b16 %v762
    %v834 = vunpack.c.l.b16 %v763
    %v835 = vunpack.c.l.b16 %v764
    %v836 = vunpack.c.l.b16 %v765
    %v837 = vunpack.c.l.b16 %v766
    %v838 = vunpack.c.l.b16 %v767
    %v839 = vunpack.c.l.b16 %v768
    %v840 = vunpack.c.l.b16 %v769
    %v841 = vunpack.c.l.b16 %v770
    %v842 = vunpack.c.l.b16 %v771
    %v843 = vunpack.c.l.b16 %v772
    %v844 = vunpack.c.l.b16 %v773
    %v845 = vunpack.c.l.b16 %v774
    %v846 = vunpack.c.l.b16 %v775
    %v847 = vunpack.c.l.b16 %v776
    %v848 = vunpack.c.l.b16 %v777
    %v849 = vunpack.c.l.b16 %v778
    %v850 = vunpack.c.l.b16 %v779
    %v851 = vunpack.c.l.b16 %v780
    %v852 = vunpack.c.l.b16 %v781
    %v853 = vunpack.c.l.b16 %v782
    %v854 = vunpack.c.l.b16 %v783
    %v855 = vunpack.c.l.b16 %v784
    %v856 = vunpack.c.l.b16 %v785
    %v857 = vunpack.c.l.b16 %v786
    %v858 = vunpack.c.l.b16 %v787
    %v859 = vunpack.c.l.b16 %v788
    %v860 = vunpack.c.l.b16 %v789
    %v861 = vpack.c.b16 %v830, %v829
    %v862 = vpack.c.b16 %v832, %v831
    %v863 = vpack.c.b16 %v834, %v833
    %v864 = vpack.c.b16 %v836, %v835
    %v865 = vpack.c.b16 %v838, %v837
    %v866 = vpack.c.b16 %v840, %v839
    %v867 = vpack.c.b16 %v842, %v841
    %v868 = vpack.c.b16 %v844, %v843
    %v869 = vpack.c.b16 %v846, %v845
    %v870 = vpack.c.b16 %v848, %v847
    %v871 = vpack.c.b16 %v850, %v849
    %v872 = vpack.c.b16 %v852, %v851
    %v873 = vpack.c.b16 %v854, %v853
    %v874 = vpack.c.b16 %v856, %v855
    %v875 = vpack.c.b16 %v858, %v857
    %v876 = vpack.c.b16 %v860, %v859
    %893 = vmatprep.subr.bf16.mxu0 0
    %894 = vmatpush1.bf16.msra.mxu0 %v861
    %895 = vmatprep.subr.bf16.mxu0 0
    %896 = vmatpush1.bf16.msra.mxu0 %v862
    %897 = vmatprep.subr.bf16.mxu0 0
    %898 = vmatpush1.bf16.msra.mxu0 %v863
    %899 = vmatprep.subr.bf16.mxu0 0
    %900 = vmatpush1.bf16.msra.mxu0 %v864
    %901 = vmatprep.subr.bf16.mxu0 0
    %902 = vmatpush1.bf16.msra.mxu0 %v865
    %903 = vmatprep.subr.bf16.mxu0 0
    %904 = vmatpush1.bf16.msra.mxu0 %v866
    %905 = vmatprep.subr.bf16.mxu0 0
    %906 = vmatpush1.bf16.msra.mxu0 %v867
    %907 = vmatprep.subr.bf16.mxu0 0
    %908 = vmatpush1.bf16.msra.mxu0 %v868
    %909 = vmatprep.subr.bf16.mxu0 0
    %910 = vmatpush1.bf16.msra.mxu0 %v869
    %911 = vmatprep.subr.bf16.mxu0 0
    %912 = vmatpush1.bf16.msra.mxu0 %v870
    %913 = vmatprep.subr.bf16.mxu0 0
    %914 = vmatpush1.bf16.msra.mxu0 %v871
    %915 = vmatprep.subr.bf16.mxu0 0
    %916 = vmatpush1.bf16.msra.mxu0 %v872
    %917 = vmatprep.subr.bf16.mxu0 0
    %918 = vmatpush1.bf16.msra.mxu0 %v873
    %919 = vmatprep.subr.bf16.mxu0 0
    %920 = vmatpush1.bf16.msra.mxu0 %v874
    %921 = vmatprep.subr.bf16.mxu0 0
    %922 = vmatpush1.bf16.msra.mxu0 %v875
    %923 = vmatprep.subr.bf16.mxu0 0
    %924 = vmatpush1.bf16.msra.mxu0 %v876
    %925 = vmatprep.mubr.bf16.mxu0 %v757
    %926 = vmatmul.mubr.bf16.gmra.mrb[0].mxu0 %v756
    %v927 = vpop.f32.mrb[0].mxu0
    %v928 = vadd.f32 %v795, %v927
    %v929 = vpop.f32.mrb[0].mxu0
    %v930 = vpop.f32.mrb[0].mxu0
    %v931 = vadd.f32 %v795, %v930
    %v932 = vpop.f32.mrb[0].mxu0
    %933 = vdwg.mxu0
    %934 = vst [vmem:[#allocation10] sm:$0xff] %v928
    %935 = vst [vmem:[#allocation10 + $0x8] sm:$0xff] %v931
    // Predicated region
    $region46: #{text_clip_forward.1} parent=1 // pred_check
      _
    $region47: #{text_clip_forward.1} parent=1 // pred_check_branch
      %937 = sbr.rel (0) target = $region49
    $region48: #{text_clip_forward.1} parent=1 // pred_region
      %s939 = ssub.s32 256, 256
      %940 = vsyncadd [#allocation4], %s939
      %s941 = sshll.u32 [#allocation10], 4
      %s942 = int_to_ptr.vmem [resolvable:$true] %s941
      %947 = dma.vmem_to_hbm [thread:$0]  %s942, 256, %s7, [#allocation4], 128, 128, 8
    $region49: #{text_clip_forward.1} parent=1 // pred_fallthru
      _
    // Predicated region
    $region50: #{text_clip_forward.1} parent=1 // pred_check
      _
    $region51: #{text_clip_forward.1} parent=1 // pred_check_branch
      %949 = sbr.rel (0) target = $region53
    $region52: #{text_clip_forward.1} parent=1 // pred_region
      %950 = dma.done [#allocation4], 256
    $region53: #{text_clip_forward.1} parent=1 // pred_fallthru
      _
    %951 = vsyncpa [#allocation3], 1
    %952 = vsyncpa [#allocation6], 1
    %953 = vsyncpa [#allocation9], 1
    %954 = vsyncpa [#allocation4], 1

</llo_original>
